<compile_context>
chip_gen: v7x
topology: tpu7x:2x2x1
jax: 0.10.0
libtpu: 0.0.40
codegen_flags: <defaults>
</compile_context>

<pallas_src>
import jax
import jax.numpy as jnp
from jax import lax
from jax.experimental import pallas as pl
from jax.experimental.pallas import tpu as pltpu

# ---------------- configuration (scaled-down HiGT defaults) -----------------
C = 128                       # gcn_out_channels / LayerNorm dim (orig 1024)
OUT_CLASSES = 2
POOL_LAST = 5                 # pool_ratio[-1]
PATCH_RATIO = 4
N_PATCH = POOL_LAST * PATCH_RATIO        # 20 patch nodes
N_REGION = POOL_LAST                     # 5 region nodes
N_THUMB = 1
FUSION_IN = N_PATCH * 2                  # 40  (= pool_ratio[-1]*patch_ratio*2)
FUSION_EXP = 4
FUSION_OUT = FUSION_IN * FUSION_EXP      # 160
FUSION_HALF = FUSION_IN // 2             # 20
LN_EPS = 1e-5

# packed activation layout (rows of the (48, C) per-sample slab)
PACK_ROWS = 48                 # 20 patch_ori + 20 patch_glob + 1 ones + 1 thumb + 6 pad
ROW_ONES = 2 * N_PATCH         # 40: ones row (bias column of w1)
ROW_THUMB = ROW_ONES + 1       # 41: thumbnail row
NEG_INF = -1e30


def higt_tail_kernel(x_ref, w1_ref, w2bar_ref, wc_ref, vec_ref, out_ref):
    """One sample per grid step.

    x_ref    : (1, 48, C)  bf16  packed activations
    w1_ref   : (160, 48)   bf16  fused fusion-conv1 weight (+bias column)
    w2bar_ref: (1, 160)    f32   mean-folded fusion-conv2 weight
    wc_ref   : (C, 128)    bf16  classifier weight padded to 128 lanes
    vec_ref  : (4, C)      f32   rows: [gamma, beta, bc_eff(-inf padded), 0]
    out_ref  : (1, 1, 128) f32   softmax probabilities (lanes >= 2 are 0)
    """
    gamma = vec_ref[0:1, :]
    beta = vec_ref[1:2, :]
    bc_eff = vec_ref[2:3, :]

    xf = x_ref[0].astype(jnp.float32)                     # (48, C)
    thumb = xf[ROW_THUMB:ROW_THUMB + 1, :]                # (1, C)

    # 1) local_patch = LayerNorm(patch_nodes_ori + thumbnail), f32 statistics.
    #    (LN is evaluated on all 48 rows; only rows < N_PATCH are kept.)
    y = xf + thumb
    mu = jnp.mean(y, axis=-1, keepdims=True)
    var = jnp.mean((y - mu) ** 2, axis=-1, keepdims=True)
    ln = (y - mu) * lax.rsqrt(var + LN_EPS) * gamma + beta

    row = lax.broadcasted_iota(jnp.int32, (PACK_ROWS, 1), 0)
    # rows 0..19 -> LayerNormed local patch, rows 20..47 -> original slab
    # (global patch nodes, ones bias-row, thumbnail & zero padding; the padded
    #  columns of w1 are zero so thumb/pad rows do not contribute).
    cat = jnp.where(row < N_PATCH, ln, xf).astype(jnp.bfloat16)   # (48, C)

    # 2) Fusion_Block stand-in: single 1x1 conv over the node axis + bias
    #    (bias folded in as column ROW_ONES of w1), ReLU.
    # TODO(synk): Fusion_Block internals not provided; this is a documented
    # 1x1-conv(40->160)->ReLU->1x1-conv(160->20) stand-in.
    h = jnp.dot(w1_ref[...], cat, preferred_element_type=jnp.float32)   # (160, C)
    h = jnp.maximum(h, 0.0)

    # 3) mean over the 20 output nodes folded into w2 -> single matvec.
    fused = jnp.dot(w2bar_ref[...], h, preferred_element_type=jnp.float32)  # (1, C)

    # 4) classifier (padded to 128 lanes; padding bias = -inf) + softmax.
    logits = jnp.dot(fused.astype(jnp.bfloat16), wc_ref[...],
                     preferred_element_type=jnp.float32) + bc_eff           # (1, 128)
    m = jnp.max(logits, axis=-1, keepdims=True)
    e = jnp.exp(logits - m)
    out_ref[0] = e / jnp.sum(e, axis=-1, keepdims=True)


def pack_params(params):
    """Pre-fold / pack the reference parameters into 4 kernel operands."""
    gamma, beta, w1a, w1b, b1, w2, b2, wc, bc = params

    # fusion conv1: [w1a | w1b | b1 | 0-pad] over a K=48 axis matching x_pack.
    w1_pack = jnp.zeros((FUSION_OUT, PACK_ROWS), jnp.float32)
    w1_pack = w1_pack.at[:, :N_PATCH].set(w1a)
    w1_pack = w1_pack.at[:, N_PATCH:2 * N_PATCH].set(w1b)
    w1_pack = w1_pack.at[:, ROW_ONES].set(b1[:, 0])
    w1_pack = w1_pack.astype(jnp.bfloat16)

    # fold mean over the 20 output nodes into w2 / b2.
    w2bar = jnp.mean(w2, axis=0, keepdims=True)              # (1, 160) f32
    b2bar = jnp.mean(b2)                                     # scalar

    # classifier padded to a 128-lane slab; mean(b2) folded into the bias;
    # padded lanes get a -inf bias so softmax zeroes them.
    wc_pad = jnp.zeros((C, C), jnp.float32).at[:, :OUT_CLASSES].set(wc)
    bc_eff = jnp.full((C,), NEG_INF, jnp.float32)
    bc_eff = bc_eff.at[:OUT_CLASSES].set(bc[0] + b2bar * jnp.sum(wc, axis=0))

    vec = jnp.zeros((4, C), jnp.float32)
    vec = vec.at[0].set(gamma[0]).at[1].set(beta[0]).at[2].set(bc_eff)

    return (w1_pack, w2bar, wc_pad.astype(jnp.bfloat16), vec)


def higt_forward(patch_nodes_ori, patch_glob, thumbnail, packed):
    """Batched tail forward.  Inputs: (B, 20, C), (B, 20, C), (B, 1, C)."""
    w1_pack, w2bar, wc_pad, vec = packed
    B = patch_nodes_ori.shape[0]

    ones_row = jnp.ones((B, 1, C), jnp.float32)
    pad = jnp.zeros((B, PACK_ROWS - ROW_THUMB - 1, C), jnp.float32)
    x_pack = jnp.concatenate(
        [patch_nodes_ori, patch_glob, ones_row, thumbnail, pad], axis=1
    ).astype(jnp.bfloat16)                                   # (B, 48, C)

    prob_pad = pl.pallas_call(
        higt_tail_kernel,
        out_shape=jax.ShapeDtypeStruct((B, 1, C), jnp.float32),
        grid=(B,),
        in_specs=[
            pl.BlockSpec((1, PACK_ROWS, C), lambda b: (b, 0, 0)),   # per-sample
            pl.BlockSpec((FUSION_OUT, PACK_ROWS), lambda b: (0, 0)),  # shared
            pl.BlockSpec((1, FUSION_OUT), lambda b: (0, 0)),          # shared
            pl.BlockSpec((C, C), lambda b: (0, 0)),                   # shared
            pl.BlockSpec((4, C), lambda b: (0, 0)),                   # shared
        ],
        out_specs=pl.BlockSpec((1, 1, C), lambda b: (b, 0, 0)),
        compiler_params=pltpu.CompilerParams(
            dimension_semantics=("parallel",)),
    )(x_pack, w1_pack, w2bar, wc_pad, vec)

    # == prob.squeeze(0) of the reference, per sample
    return prob_pad[:, 0, :OUT_CLASSES]


def init_params(key):
    k1, k2, k3 = jax.random.split(key, 3)
    # LayerNorm: weight=1, bias=0 (per HiGT.init_parameters)
    gamma = jnp.ones((1, C), jnp.float32)
    beta = jnp.zeros((1, C), jnp.float32)
    # Fusion 1x1 conv weights: kaiming_normal(fan_out) -> std = sqrt(2/fan_out)
    w1 = jax.random.normal(k1, (FUSION_OUT, FUSION_IN), jnp.float32) \
        * jnp.sqrt(2.0 / FUSION_OUT)
    w1a, w1b = w1[:, :N_PATCH], w1[:, N_PATCH:]
    b1 = jnp.zeros((FUSION_OUT, 1), jnp.float32)
    w2 = jax.random.normal(k2, (FUSION_HALF, FUSION_OUT), jnp.float32) \
        * jnp.sqrt(2.0 / FUSION_HALF)
    b2 = jnp.zeros((FUSION_HALF, 1), jnp.float32)
    # Classifier Linear: trunc_normal(std=0.02), bias=0
    wc = 0.02 * jax.random.truncated_normal(
        k3, -2.0, 2.0, (C, OUT_CLASSES), jnp.float32)
    bc = jnp.zeros((1, OUT_CLASSES), jnp.float32)
    return (gamma, beta, w1a, w1b, b1, w2, b2, wc, bc)


if __name__ == "__main__":
    key = jax.random.PRNGKey(0)
    kx, kp = jax.random.split(key)

    B = 8
    # Synthetic graphs: node_type 0 = thumbnail (1), 1 = region (5), 2 = patch (20)
    n_nodes = N_THUMB + N_REGION + N_PATCH
    x_nodes = jax.random.normal(kx, (B, n_nodes, C), jnp.float32)

    # TODO(synk): H2GCN (GENConv + SAGPooling) source not provided; node
    # features pass through the "gcn" unchanged here.
    thumbnail = x_nodes[:, :N_THUMB]                              # type 0
    region_nodes = x_nodes[:, N_THUMB:N_THUMB + N_REGION]         # type 1 (unused, as in ref)
    patch_nodes = x_nodes[:, N_THUMB + N_REGION:]                 # type 2
    # Exactly last_pool_ratio*patch_ratio patch nodes, so the data-dependent
    # padding branch in the reference forward is not taken.
    patch_nodes_ori = patch_nodes
    # TODO(synk): MobileHIT_Block source not provided; the mhit stack is an
    # identity pass-through.
    patch_glob = patch_nodes

    params = init_params(kp)
    packed = pack_params(params)
    prob = higt_forward(patch_nodes_ori, patch_glob, thumbnail, packed)
    prob = jax.block_until_ready(prob)

    assert prob.shape == (B, OUT_CLASSES)
    assert bool(jnp.isfinite(prob).all())
    assert bool(jnp.all(jnp.abs(jnp.sum(prob, axis=-1) - 1.0) < 1e-5))
    print("KERNEL_OK")
</pallas_src>

<mosaic_0001>
module attributes {stable_mosaic.version = 11 : i64} {
  func.func @higt_tail_kernel(%arg0: i32, %arg1: memref<1x48x128xbf16, #tpu.memory_space<vmem>>, %arg2: memref<160x48xbf16, #tpu.memory_space<vmem>>, %arg3: memref<1x160xf32, #tpu.memory_space<vmem>>, %arg4: memref<128x128xbf16, #tpu.memory_space<vmem>>, %arg5: memref<4x128xf32, #tpu.memory_space<vmem>>, %arg6: memref<1x1x128xf32, #tpu.memory_space<vmem>>) attributes {dimension_semantics = [#tpu.dimension_semantics<parallel>], iteration_bounds = array<i64: 8>, scalar_prefetch = 0 : i64, scratch_operands = 0 : i64, tpu.core_type = #tpu.core_type<tc>, window_params = [{transform_indices = @transform_0, window_bounds = array<i64: 1, 48, 128>}, {pipeline_mode = #tpu.pipeline_mode<synchronous>, transform_indices = @transform_1, window_bounds = array<i64: 160, 48>}, {pipeline_mode = #tpu.pipeline_mode<synchronous>, transform_indices = @transform_2, window_bounds = array<i64: 1, 160>}, {pipeline_mode = #tpu.pipeline_mode<synchronous>, transform_indices = @transform_3, window_bounds = array<i64: 128, 128>}, {pipeline_mode = #tpu.pipeline_mode<synchronous>, transform_indices = @transform_4, window_bounds = array<i64: 4, 128>}, {transform_indices = @transform_5, window_bounds = array<i64: 1, 1, 128>}]} {
    %c0 = arith.constant 0 : index
    %c0_0 = arith.constant 0 : index
    %0 = vector.load %arg5[%c0, %c0_0] : memref<4x128xf32, #tpu.memory_space<vmem>>, vector<1x128xf32>
    %c1 = arith.constant 1 : index
    %c0_1 = arith.constant 0 : index
    %1 = vector.load %arg5[%c1, %c0_1] : memref<4x128xf32, #tpu.memory_space<vmem>>, vector<1x128xf32>
    %c2 = arith.constant 2 : index
    %c0_2 = arith.constant 0 : index
    %2 = vector.load %arg5[%c2, %c0_2] : memref<4x128xf32, #tpu.memory_space<vmem>>, vector<1x128xf32>
    %c0_3 = arith.constant 0 : index
    %c0_4 = arith.constant 0 : index
    %c0_5 = arith.constant 0 : index
    %3 = vector.load %arg1[%c0_3, %c0_4, %c0_5] : memref<1x48x128xbf16, #tpu.memory_space<vmem>>, vector<1x48x128xbf16>
    %4 = vector.shape_cast %3 : vector<1x48x128xbf16> to vector<48x128xbf16>
    %5 = arith.extf %4 : vector<48x128xbf16> to vector<48x128xf32>
    %6 = vector.extract_strided_slice %5 {offsets = [41, 0], sizes = [1, 128], strides = [1, 1]} : vector<48x128xf32> to vector<1x128xf32>
    %7 = vector.broadcast %6 : vector<1x128xf32> to vector<48x128xf32>
    %8 = arith.addf %5, %7 : vector<48x128xf32>
    %cst = arith.constant dense<0.000000e+00> : vector<48xf32>
    %9 = vector.multi_reduction <add>, %8, %cst [1] : vector<48x128xf32> to vector<48xf32>
    %10 = vector.shape_cast %9 : vector<48xf32> to vector<48x1xf32>
    %cst_6 = arith.constant 1.280000e+02 : f32
    %11 = vector.broadcast %cst_6 : f32 to vector<48x1xf32>
    %12 = arith.divf %10, %11 : vector<48x1xf32>
    %13 = vector.broadcast %12 : vector<48x1xf32> to vector<48x128xf32>
    %14 = arith.subf %8, %13 : vector<48x128xf32>
    %15 = arith.mulf %14, %14 : vector<48x128xf32>
    %cst_7 = arith.constant dense<0.000000e+00> : vector<48xf32>
    %16 = vector.multi_reduction <add>, %15, %cst_7 [1] : vector<48x128xf32> to vector<48xf32>
    %17 = vector.shape_cast %16 : vector<48xf32> to vector<48x1xf32>
    %cst_8 = arith.constant 1.280000e+02 : f32
    %18 = vector.broadcast %cst_8 : f32 to vector<48x1xf32>
    %19 = arith.divf %17, %18 : vector<48x1xf32>
    %20 = vector.broadcast %12 : vector<48x1xf32> to vector<48x128xf32>
    %21 = arith.subf %8, %20 : vector<48x128xf32>
    %cst_9 = arith.constant 9.99999974E-6 : f32
    %22 = vector.broadcast %cst_9 : f32 to vector<48x1xf32>
    %23 = arith.addf %19, %22 : vector<48x1xf32>
    %24 = math.rsqrt %23 : vector<48x1xf32>
    %25 = vector.broadcast %24 : vector<48x1xf32> to vector<48x128xf32>
    %26 = arith.mulf %21, %25 : vector<48x128xf32>
    %27 = vector.broadcast %0 : vector<1x128xf32> to vector<48x128xf32>
    %28 = arith.mulf %26, %27 : vector<48x128xf32>
    %29 = vector.broadcast %1 : vector<1x128xf32> to vector<48x128xf32>
    %30 = arith.addf %28, %29 : vector<48x128xf32>
    %31 = tpu.iota {dimensions = array<i32: 0>} : vector<48x1xi32>
    %c20_i32 = arith.constant 20 : i32
    %32 = vector.broadcast %c20_i32 : i32 to vector<48x1xi32>
    %33 = arith.cmpi slt, %31, %32 : vector<48x1xi32>
    %34 = vector.shape_cast %33 : vector<48x1xi1> to vector<48x1xi1>
    %35 = vector.broadcast %34 : vector<48x1xi1> to vector<48x128xi1>
    %36 = arith.select %35, %30, %5 : vector<48x128xi1>, vector<48x128xf32>
    %37 = arith.truncf %36 : vector<48x128xf32> to vector<48x128xbf16>
    %c0_10 = arith.constant 0 : index
    %c0_11 = arith.constant 0 : index
    %38 = vector.load %arg2[%c0_10, %c0_11] : memref<160x48xbf16, #tpu.memory_space<vmem>>, vector<160x48xbf16>
    %cst_12 = arith.constant dense<0.000000e+00> : vector<160x128xf32>
    %39 = tpu.matmul %38, %37, %cst_12 {dimension_numbers = #tpu.dot_dimension_numbers<[1], [0], [0], [1], [0, 0, 1, 1], [], []>} : vector<160x48xbf16>, vector<48x128xbf16>, vector<160x128xf32> -> vector<160x128xf32>
    %cst_13 = arith.constant 0.000000e+00 : f32
    %40 = vector.broadcast %cst_13 : f32 to vector<160x128xf32>
    %41 = arith.maximumf %39, %40 : vector<160x128xf32>
    %c0_14 = arith.constant 0 : index
    %c0_15 = arith.constant 0 : index
    %42 = vector.load %arg3[%c0_14, %c0_15] : memref<1x160xf32, #tpu.memory_space<vmem>>, vector<1x160xf32>
    %cst_16 = arith.constant dense<0.000000e+00> : vector<1x128xf32>
    %43 = tpu.matmul %42, %41, %cst_16 {dimension_numbers = #tpu.dot_dimension_numbers<[1], [0], [0], [1], [0, 0, 1, 1], [], []>} : vector<1x160xf32>, vector<160x128xf32>, vector<1x128xf32> -> vector<1x128xf32>
    %44 = arith.truncf %43 : vector<1x128xf32> to vector<1x128xbf16>
    %c0_17 = arith.constant 0 : index
    %c0_18 = arith.constant 0 : index
    %45 = vector.load %arg4[%c0_17, %c0_18] : memref<128x128xbf16, #tpu.memory_space<vmem>>, vector<128x128xbf16>
    %cst_19 = arith.constant dense<0.000000e+00> : vector<1x128xf32>
    %46 = tpu.matmul %44, %45, %cst_19 {dimension_numbers = #tpu.dot_dimension_numbers<[1], [0], [0], [1], [0, 0, 1, 1], [], []>} : vector<1x128xbf16>, vector<128x128xbf16>, vector<1x128xf32> -> vector<1x128xf32>
    %47 = arith.addf %46, %2 : vector<1x128xf32>
    %cst_20 = arith.constant dense<0xFF800000> : vector<1xf32>
    %48 = vector.multi_reduction <maximumf>, %47, %cst_20 [1] : vector<1x128xf32> to vector<1xf32>
    %49 = vector.shape_cast %48 : vector<1xf32> to vector<1x1xf32>
    %50 = vector.broadcast %49 : vector<1x1xf32> to vector<1x128xf32>
    %51 = arith.subf %47, %50 : vector<1x128xf32>
    %52 = math.exp %51 : vector<1x128xf32>
    %cst_21 = arith.constant dense<0.000000e+00> : vector<1xf32>
    %53 = vector.multi_reduction <add>, %52, %cst_21 [1] : vector<1x128xf32> to vector<1xf32>
    %54 = vector.shape_cast %53 : vector<1xf32> to vector<1x1xf32>
    %55 = vector.broadcast %54 : vector<1x1xf32> to vector<1x128xf32>
    %56 = arith.divf %52, %55 : vector<1x128xf32>
    %c0_22 = arith.constant 0 : index
    %c0_23 = arith.constant 0 : index
    %c0_24 = arith.constant 0 : index
    %57 = vector.load %arg6[%c0_22, %c0_23, %c0_24] : memref<1x1x128xf32, #tpu.memory_space<vmem>>, vector<1x1x128xf32>
    %58 = vector.shape_cast %57 : vector<1x1x128xf32> to vector<1x128xf32>
    %59 = vector.shape_cast %56 : vector<1x128xf32> to vector<1x1x128xf32>
    tpu.vector_store %arg6[%c0_22, %c0_23, %c0_24], %59 {strides = array<i32>} : memref<1x1x128xf32, #tpu.memory_space<vmem>>, vector<1x1x128xf32>,
    return
  }
  func.func @transform_0(%arg0: i32) -> (i32, i32, i32) {
    %c0_i32 = arith.constant 0 : i32
    %c0_i32_0 = arith.constant 0 : i32
    %c0_i32_1 = arith.constant 0 : i32
    return %arg0, %c0_i32, %c0_i32_0 : i32, i32, i32
  }
  func.func @transform_1(%arg0: i32) -> (i32, i32) {
    %c0_i32 = arith.constant 0 : i32
    %c0_i32_0 = arith.constant 0 : i32
    %c0_i32_1 = arith.constant 0 : i32
    return %c0_i32, %c0_i32_0 : i32, i32
  }
  func.func @transform_2(%arg0: i32) -> (i32, i32) {
    %c0_i32 = arith.constant 0 : i32
    %c0_i32_0 = arith.constant 0 : i32
    %c0_i32_1 = arith.constant 0 : i32
    return %c0_i32, %c0_i32_0 : i32, i32
  }
  func.func @transform_3(%arg0: i32) -> (i32, i32) {
    %c0_i32 = arith.constant 0 : i32
    %c0_i32_0 = arith.constant 0 : i32
    %c0_i32_1 = arith.constant 0 : i32
    return %c0_i32, %c0_i32_0 : i32, i32
  }
  func.func @transform_4(%arg0: i32) -> (i32, i32) {
    %c0_i32 = arith.constant 0 : i32
    %c0_i32_0 = arith.constant 0 : i32
    %c0_i32_1 = arith.constant 0 : i32
    return %c0_i32, %c0_i32_0 : i32, i32
  }
  func.func @transform_5(%arg0: i32) -> (i32, i32, i32) {
    %c0_i32 = arith.constant 0 : i32
    %c0_i32_0 = arith.constant 0 : i32
    %c0_i32_1 = arith.constant 0 : i32
    return %arg0, %c0_i32, %c0_i32_0 : i32, i32, i32
  }
}

</mosaic_0001>

<llo_original>
// kernel: tpu_custom_call.1
$region0: #{tpu_custom_call.1}
  #allocation0 [shape = 'u32[]', space=smem, size = 0x4, offset = 0x4, fixed_abs, tag = 'smem constant byte address 0x4 - core index']
  #allocation1 [shape = 'u32[144,128]{1,0:T(1,128)}', space=vmem, size = 0x12000, scoped, tag = 'internal scratch']
  %s0 = inlined_call_operand.hbm [shape: bf16[8,48,128], index: 0, kind: input, shape index: {}]
  %s1 = inlined_call_operand.vmem [shape: bf16[160,48], index: 1, kind: input, shape index: {}]
  %s2 = inlined_call_operand.vmem [shape: f32[1,160], index: 2, kind: input, shape index: {}]
  %s3 = inlined_call_operand.vmem [shape: bf16[128,128], index: 3, kind: input, shape index: {}]
  %s4 = inlined_call_operand.vmem [shape: f32[4,128], index: 4, kind: input, shape index: {}]
  %s5 = inlined_call_operand.hbm [shape: f32[8,1,128], index: 5, kind: output, shape index: {}]
  %s6 = sld [smem:[#allocation0]]
  $region57: #{tpu_custom_call.1} parent=0
    _
  %s8 = ssub.s32 1, %s6
  %s9 = scalar_select 0, %s8, %s6
  $region1: #{tpu_custom_call.1} parent=0
    #allocation2 [shape = 'u8[24576]{0}', space=vmem, size = 0x6000, scoped, tag = 'input window, operand 0']
    #allocation3 [shape = 's32[2]{0}', space=sflag, size = 0x8, scoped, tag = 'scoped memory for tpu_custom_call.1']
    #allocation4 [shape = 's32[2]{0}', space=sflag, size = 0x8, scoped, tag = 'scoped memory for tpu_custom_call.1']
    #allocation5 [shape = 'u8[1024]{0}', space=vmem, size = 0x400, scoped, tag = 'output window, operand 0']
    %10 = vsyncpa [#allocation3], 0
    %s11 = scalar_lea.sflag [#allocation3], 1
    %12 = vsyncpa %s11, 0
    %13 = vsyncpa [#allocation4], 0
    %s14 = scalar_lea.sflag [#allocation4], 1
    %15 = vsyncpa %s14, 0
    loop: start=0, step=1, limit=10
    $region2: #{tpu_custom_call.1} parent=1 // loop_pre_header
      _
    $region3: #{tpu_custom_call.1} parent=1 // loop_header
      %s17 = sphi 0, %s21
      %p18 = scmp.ge.s32.totalorder %s17, 10
      %s27 = sphi 0, %s29
      %s30 = sphi 0, %s27
      %s31 = sphi 0, %s30
      %s47 = sphi 0, %s31
      %s51 = sphi 0, %s51
      %s53 = sphi 0, %s51
      %s54 = sphi 0, %s53
      %s68 = sphi 0, %s54
      %s72 = sphi 0, %s72
      %s74 = sphi 0, %s72
      %s75 = sphi 0, %s74
      %s89 = sphi 0, %s75
      %s93 = sphi 0, %s93
      %s95 = sphi 0, %s93
      %s96 = sphi 0, %s95
      %s110 = sphi 0, %s96
      %s114 = sphi 0, %s114
      %s116 = sphi 0, %s114
      %s117 = sphi 0, %s116
      %s131 = sphi 0, %s117
      %s137 = sphi 0, %s139
      %s140 = sphi 0, %s137
      %s141 = sphi 0, %s140
      %s157 = sphi 0, %s141
    $region4: #{tpu_custom_call.1} parent=1 // loop_header_branch
      %20 = sbr.rel (%p18) target = $region8
    $region5: #{tpu_custom_call.1} parent=1 // loop_body
      %s22 = ssub.s32 %s17, 1
      %s23 = ssub.s32 %s17, 2
      %s24 = sadd.s32 %s17, 1
      %s25 = ssub.s32 %s17, %s24
      %p26 = scmp.eq.s32.totalorder %s25, 0
      %s28 = sadd.s32 %s27, 1
      %s29 = scalar_select %p26, %s27, %s28
      %p32 = pneg %p26
      %p33 = scmp.eq.s32.totalorder %s17, 7
      %p34 = por %p32, %p33
      %p35 = scmp.ne.s32.totalorder %s27, %s30
      %p36 = scmp.eq.s32.totalorder %s17, 0
      %p37 = por %p35, %p36
      %p38 = scmp.ne.s32.totalorder %s27, %s30
      %p39 = scmp.eq.s32.totalorder %s22, 7
      %p40 = por %p38, %p39
      %p41 = scmp.ne.s32.totalorder %s30, %s31
      %p42 = scmp.eq.s32.totalorder %s22, 0
      %p43 = por %p41, %p42
      %p44 = scmp.ne.s32.totalorder %s30, %s31
      %p45 = scmp.eq.s32.totalorder %s23, 7
      %p46 = por %p44, %p45
      %p48 = scmp.ne.s32.totalorder %s31, %s47
      %p49 = scmp.eq.s32.totalorder %s23, 0
      %p50 = por %p48, %p49
      %s52 = sadd.s32 %s51, 1
      %p55 = scmp.eq.s32.totalorder %s17, 7
      %p56 = scmp.ne.s32.totalorder %s51, %s53
      %p57 = scmp.eq.s32.totalorder %s17, 0
      %p58 = por %p56, %p57
      %p59 = scmp.ne.s32.totalorder %s51, %s53
      %p60 = scmp.eq.s32.totalorder %s22, 7
      %p61 = por %p59, %p60
      %p62 = scmp.ne.s32.totalorder %s53, %s54
      %p63 = scmp.eq.s32.totalorder %s22, 0
      %p64 = por %p62, %p63
      %p65 = scmp.ne.s32.totalorder %s53, %s54
      %p66 = scmp.eq.s32.totalorder %s23, 7
      %p67 = por %p65, %p66
      %p69 = scmp.ne.s32.totalorder %s54, %s68
      %p70 = scmp.eq.s32.totalorder %s23, 0
      %p71 = por %p69, %p70
      %s73 = sadd.s32 %s72, 1
      %p76 = scmp.eq.s32.totalorder %s17, 7
      %p77 = scmp.ne.s32.totalorder %s72, %s74
      %p78 = scmp.eq.s32.totalorder %s17, 0
      %p79 = por %p77, %p78
      %p80 = scmp.ne.s32.totalorder %s72, %s74
      %p81 = scmp.eq.s32.totalorder %s22, 7
      %p82 = por %p80, %p81
      %p83 = scmp.ne.s32.totalorder %s74, %s75
      %p84 = scmp.eq.s32.totalorder %s22, 0
      %p85 = por %p83, %p84
      %p86 = scmp.ne.s32.totalorder %s74, %s75
      %p87 = scmp.eq.s32.totalorder %s23, 7
      %p88 = por %p86, %p87
      %p90 = scmp.ne.s32.totalorder %s75, %s89
      %p91 = scmp.eq.s32.totalorder %s23, 0
      %p92 = por %p90, %p91
      %s94 = sadd.s32 %s93, 1
      %p97 = scmp.eq.s32.totalorder %s17, 7
      %p98 = scmp.ne.s32.totalorder %s93, %s95
      %p99 = scmp.eq.s32.totalorder %s17, 0
      %p100 = por %p98, %p99
      %p101 = scmp.ne.s32.totalorder %s93, %s95
      %p102 = scmp.eq.s32.totalorder %s22, 7
      %p103 = por %p101, %p102
      %p104 = scmp.ne.s32.totalorder %s95, %s96
      %p105 = scmp.eq.s32.totalorder %s22, 0
      %p106 = por %p104, %p105
      %p107 = scmp.ne.s32.totalorder %s95, %s96
      %p108 = scmp.eq.s32.totalorder %s23, 7
      %p109 = por %p107, %p108
      %p111 = scmp.ne.s32.totalorder %s96, %s110
      %p112 = scmp.eq.s32.totalorder %s23, 0
      %p113 = por %p111, %p112
      %s115 = sadd.s32 %s114, 1
      %p118 = scmp.eq.s32.totalorder %s17, 7
      %p119 = scmp.ne.s32.totalorder %s114, %s116
      %p120 = scmp.eq.s32.totalorder %s17, 0
      %p121 = por %p119, %p120
      %p122 = scmp.ne.s32.totalorder %s114, %s116
      %p123 = scmp.eq.s32.totalorder %s22, 7
      %p124 = por %p122, %p123
      %p125 = scmp.ne.s32.totalorder %s116, %s117
      %p126 = scmp.eq.s32.totalorder %s22, 0
      %p127 = por %p125, %p126
      %p128 = scmp.ne.s32.totalorder %s116, %s117
      %p129 = scmp.eq.s32.totalorder %s23, 7
      %p130 = por %p128, %p129
      %p132 = scmp.ne.s32.totalorder %s117, %s131
      %p133 = scmp.eq.s32.totalorder %s23, 0
      %p134 = por %p132, %p133
      %s135 = ssub.s32 %s17, %s24
      %p136 = scmp.eq.s32.totalorder %s135, 0
      %s138 = sadd.s32 %s137, 1
      %s139 = scalar_select %p136, %s137, %s138
      %p142 = pneg %p136
      %p143 = scmp.eq.s32.totalorder %s17, 7
      %p144 = por %p142, %p143
      %p145 = scmp.ne.s32.totalorder %s137, %s140
      %p146 = scmp.eq.s32.totalorder %s17, 0
      %p147 = por %p145, %p146
      %p148 = scmp.ne.s32.totalorder %s137, %s140
      %p149 = scmp.eq.s32.totalorder %s22, 7
      %p150 = por %p148, %p149
      %p151 = scmp.ne.s32.totalorder %s140, %s141
      %p152 = scmp.eq.s32.totalorder %s22, 0
      %p153 = por %p151, %p152
      %p154 = scmp.ne.s32.totalorder %s140, %s141
      %p155 = scmp.eq.s32.totalorder %s23, 7
      %p156 = por %p154, %p155
      %p158 = scmp.ne.s32.totalorder %s141, %s157
      %p159 = scmp.eq.s32.totalorder %s23, 0
      %p160 = por %p158, %p159
      %p161 = scmp.le.s32.totalorder 1, %s17
      %p162 = scmp.lt.s32.totalorder %s17, 9
      %p163 = pnand %p161, %p162
      %p164 = pneg %p163
      // Predicated region
      $region9: #{tpu_custom_call.1} parent=5 // pred_check
        _
      $region10: #{tpu_custom_call.1} parent=5 // pred_check_branch
        %166 = sbr.rel (%p163) target = $region12
      $region11: #{tpu_custom_call.1} parent=5 // pred_region
        %s167 = ssub.s32 %s17, 1
        // Predicated region
        $region13: #{tpu_custom_call.1} parent=11 // pred_check
          %p168 = pneg %p64
        $region14: #{tpu_custom_call.1} parent=11 // pred_check_branch
          %170 = sbr.rel (%p168) target = $region16
        $region15: #{tpu_custom_call.1} parent=11 // pred_region
          _
        $region16: #{tpu_custom_call.1} parent=11 // pred_fallthru
          _
        // Predicated region
        $region17: #{tpu_custom_call.1} parent=11 // pred_check
          %p171 = pneg %p85
        $region18: #{tpu_custom_call.1} parent=11 // pred_check_branch
          %173 = sbr.rel (%p171) target = $region20
        $region19: #{tpu_custom_call.1} parent=11 // pred_region
          _
        $region20: #{tpu_custom_call.1} parent=11 // pred_fallthru
          _
        // Predicated region
        $region21: #{tpu_custom_call.1} parent=11 // pred_check
          %p174 = pneg %p106
        $region22: #{tpu_custom_call.1} parent=11 // pred_check_branch
          %176 = sbr.rel (%p174) target = $region24
        $region23: #{tpu_custom_call.1} parent=11 // pred_region
          _
        $region24: #{tpu_custom_call.1} parent=11 // pred_fallthru
          _
        // Predicated region
        $region25: #{tpu_custom_call.1} parent=11 // pred_check
          %p177 = pneg %p127
        $region26: #{tpu_custom_call.1} parent=11 // pred_check_branch
          %179 = sbr.rel (%p177) target = $region28
        $region27: #{tpu_custom_call.1} parent=11 // pred_region
          _
        $region28: #{tpu_custom_call.1} parent=11 // pred_fallthru
          _
      $region12: #{tpu_custom_call.1} parent=5 // pred_fallthru
        _
      %p180 = scmp.lt.s32.totalorder %s17, 8
      // Predicated region
      $region29: #{tpu_custom_call.1} parent=5 // pred_check
        %p181 = pneg %p180
      $region30: #{tpu_custom_call.1} parent=5 // pred_check_branch
        %183 = sbr.rel (%p181) target = $region32
      $region31: #{tpu_custom_call.1} parent=5 // pred_region
        // Predicated region
        $region33: #{tpu_custom_call.1} parent=31 // pred_check
          %p184 = pneg %p37
        $region34: #{tpu_custom_call.1} parent=31 // pred_check_branch
          %186 = sbr.rel (%p184) target = $region36
        $region35: #{tpu_custom_call.1} parent=31 // pred_region
          %s187 = sand.u32 %s27, 1
          %s188 = scalar_lea.sflag [#allocation3], %s187
          %s189 = sand.u32 %s27, 1
          %s190 = smul.addr %s189, 24
          %s191 = scalar_lea.vmem [#allocation2], %s190
          %s193 = ssub.s32 384, 384
          %194 = vsyncadd %s188, %s193
          %s195 = smul.addr %s17, 6
          %s196 = smul.addr %s195, 64
          %s197 = scalar_lea.hbm %s0, %s196
          %s198 = sshll.u32 %s191, 4
          %s199 = int_to_ptr.vmem [resolvable:$true] %s198
          %204 = dma.hbm_to_vmem [thread:$0]  %s197, 384, %s199, %s188, 64, 64, 4
        $region36: #{tpu_custom_call.1} parent=31 // pred_fallthru
          _
      $region32: #{tpu_custom_call.1} parent=5 // pred_fallthru
        _
      %p205 = scmp.le.s32.totalorder 1, %s17
      %p206 = scmp.lt.s32.totalorder %s17, 9
      %p207 = pnand %p205, %p206
      %p208 = pneg %p207
      // Predicated region
      $region37: #{tpu_custom_call.1} parent=5 // pred_check
        _
      $region38: #{tpu_custom_call.1} parent=5 // pred_check_branch
        %210 = sbr.rel (%p207) target = $region40
      $region39: #{tpu_custom_call.1} parent=5 // pred_region
        %s211 = ssub.s32 %s17, 1
        %s212 = sand.u32 %s30, 1
        %s213 = scalar_lea.sflag [#allocation3], %s212
        %s214 = sand.u32 %s30, 1
        %s215 = smul.addr %s214, 24
        %s216 = scalar_lea.vmem [#allocation2], %s215
        // Predicated region
        $region41: #{tpu_custom_call.1} parent=39 // pred_check
          %p217 = pneg %p43
        $region42: #{tpu_custom_call.1} parent=39 // pred_check_branch
          %219 = sbr.rel (%p217) target = $region44
        $region43: #{tpu_custom_call.1} parent=39 // pred_region
          %220 = dma.done %s213, 384
        $region44: #{tpu_custom_call.1} parent=39 // pred_fallthru
          _
        %s221 = sand.u32 %s30, 1
        %s222 = scalar_lea.sflag [#allocation3], %s221
        %s223 = sand.u32 %s30, 1
        %s224 = smul.addr %s223, 24
        %s225 = scalar_lea.vmem [#allocation2], %s224
        %p226 = pneg %p43
        %p227 = pneg %p40
        %p228 = pneg %p64
        %p229 = pneg %p61
        %p230 = pneg %p85
        %p231 = pneg %p82
        %p232 = pneg %p106
        %p233 = pneg %p103
        %p234 = pneg %p127
        %p235 = pneg %p124
        %p236 = pneg %p153
        %p237 = pneg %p150
        %s238 = sand.u32 %s140, 1
        %s239 = scalar_lea.sflag [#allocation4], %s238
        %s240 = sand.u32 %s140, 1
        %s241 = scalar_lea.vmem [#allocation5], %s240
        %v243 = vld [vmem:[%s4] sm:$0x1]
        %v244 = vld [vmem:[%s4 + $0x1] sm:$0x1]
        %v245 = vld [vmem:[%s4 + $0x2] sm:$0x1]
        %v246 = vld [vmem:[%s216] sm:$0xf]
        %v247 = vld [vmem:[%s216 + $0x4] sm:$0xf]
        %v248 = vld [vmem:[%s216 + $0x8] sm:$0xf]
        %v249 = vld [vmem:[%s216 + $0xc] sm:$0xf]
        %v250 = vld [vmem:[%s216 + $0x10] sm:$0xf]
        %v251 = vld [vmem:[%s216 + $0x14] sm:$0xf]
        %v252 = vunpack.c.l.bf16 %v246
        %v253 = vunpack.c.l.bf16 %v247
        %v254 = vunpack.c.l.bf16 %v248
        %v255 = vunpack.c.l.bf16 %v249
        %v256 = vunpack.c.l.bf16 %v250
        %v257 = vunpack.c.l.bf16 %v251
        %v258 = vlaneseq
        %v259 = vshrl.u32 %v258, 7
        %v260 = vsub.s32 1, %v259
        %v261 = vrot.slane %v257, %v260
        %v262 = vadd.f32 %v252, %v261
        %v263 = vadd.f32 %v253, %v261
        %v264 = vadd.f32 %v254, %v261
        %v265 = vadd.f32 %v255, %v261
        %v266 = vadd.f32 %v256, %v261
        %v267 = vadd.f32 %v257, %v261
        %268 = vadd.xlane.f32.xlu0 %v262
        %v269 = vpop.xlane.xlu0 %268
        %270 = vadd.xlane.f32.xlu0 %v263
        %v271 = vpop.xlane.xlu0 %270
        %272 = vadd.xlane.f32.xlu0 %v264
        %v273 = vpop.xlane.xlu0 %272
        %274 = vadd.xlane.f32.xlu0 %v265
        %v275 = vpop.xlane.xlu0 %274
        %276 = vadd.xlane.f32.xlu0 %v266
        %v277 = vpop.xlane.xlu0 %276
        %278 = vadd.xlane.f32.xlu0 %v267
        %v279 = vpop.xlane.xlu0 %278
        %v280 = vrcp.pop 128.0
        %v281 = vmul.f32 %v269, %v280
        %v282 = vmul.f32 %v271, %v280
        %v283 = vmul.f32 %v273, %v280
        %v284 = vmul.f32 %v275, %v280
        %v285 = vmul.f32 %v277, %v280
        %v286 = vmul.f32 %v279, %v280
        %v287 = vsub.f32 %v262, %v281
        %v288 = vsub.f32 %v263, %v282
        %v289 = vsub.f32 %v264, %v283
        %v290 = vsub.f32 %v265, %v284
        %v291 = vsub.f32 %v266, %v285
        %v292 = vsub.f32 %v267, %v286
        %v293 = vmul.f32 %v287, %v287
        %v294 = vmul.f32 %v288, %v288
        %v295 = vmul.f32 %v289, %v289
        %v296 = vmul.f32 %v290, %v290
        %v297 = vmul.f32 %v291, %v291
        %v298 = vmul.f32 %v292, %v292
        %299 = vadd.xlane.f32.xlu0 %v293
        %v300 = vpop.xlane.xlu0 %299
        %301 = vadd.xlane.f32.xlu0 %v294
        %v302 = vpop.xlane.xlu0 %301
        %303 = vadd.xlane.f32.xlu0 %v295
        %v304 = vpop.xlane.xlu0 %303
        %305 = vadd.xlane.f32.xlu0 %v296
        %v306 = vpop.xlane.xlu0 %305
        %307 = vadd.xlane.f32.xlu0 %v297
        %v308 = vpop.xlane.xlu0 %307
        %309 = vadd.xlane.f32.xlu0 %v298
        %v310 = vpop.xlane.xlu0 %309
        %v311 = vmul.f32 %v300, %v280
        %v312 = vmul.f32 %v302, %v280
        %v313 = vmul.f32 %v304, %v280
        %v314 = vmul.f32 %v306, %v280
        %v315 = vmul.f32 %v308, %v280
        %v316 = vmul.f32 %v310, %v280
        %v317 = vadd.f32 %v311, 1e-05
        %v318 = vadd.f32 %v312, 1e-05
        %v319 = vadd.f32 %v313, 1e-05
        %v320 = vadd.f32 %v314, 1e-05
        %v321 = vadd.f32 %v315, 1e-05
        %v322 = vadd.f32 %v316, 1e-05
        %v323 = vrsqrt.pop %v317
        %v324 = vrsqrt.pop %v318
        %v325 = vrsqrt.pop %v319
        %v326 = vrsqrt.pop %v320
        %v327 = vrsqrt.pop %v321
        %v328 = vrsqrt.pop %v322
        %v329 = vmul.f32 %v287, %v323
        %v330 = vmul.f32 %v288, %v324
        %v331 = vmul.f32 %v289, %v325
        %v332 = vmul.f32 %v290, %v326
        %v333 = vmul.f32 %v291, %v327
        %v334 = vmul.f32 %v292, %v328
        %v335 = vlaneseq
        %v336 = vshrl.u32 %v335, 7
        %v337 = vsub.s32 0, %v336
        %v338 = vrot.slane %v243, %v337
        %v339 = vmul.f32 %v329, %v338
        %v340 = vmul.f32 %v330, %v338
        %v341 = vmul.f32 %v331, %v338
        %v342 = vmul.f32 %v332, %v338
        %v343 = vmul.f32 %v333, %v338
        %v344 = vmul.f32 %v334, %v338
        %v345 = vlaneseq
        %v346 = vshrl.u32 %v345, 7
        %v347 = vsub.s32 0, %v346
        %v348 = vrot.slane %v244, %v347
        %v349 = vadd.f32 %v339, %v348
        %v350 = vadd.f32 %v340, %v348
        %v351 = vadd.f32 %v341, %v348
        %v352 = vadd.f32 %v342, %v348
        %v353 = vadd.f32 %v343, %v348
        %v354 = vadd.f32 %v344, %v348
        %v355 = vlaneseq
        %v356 = vshrl.u32 %v355, 7
        %v357 = vadd.s32 %v356, 8
        %v358 = vadd.s32 %v356, 16
        %v359 = vadd.s32 %v356, 24
        %v360 = vadd.s32 %v356, 32
        %v361 = vadd.s32 %v356, 40
        %vm362 = vcmp.lt.s32.totalorder %v356, 20
        %vm363 = vcmp.lt.s32.totalorder %v357, 20
        %vm364 = vcmp.lt.s32.totalorder %v358, 20
        %vm365 = vcmp.lt.s32.totalorder %v359, 20
        %vm366 = vcmp.lt.s32.totalorder %v360, 20
        %vm367 = vcmp.lt.s32.totalorder %v361, 20
        %v368 = vsel %vm362, 1, 0
        %v369 = vsel %vm363, 1, 0
        %v370 = vsel %vm364, 1, 0
        %v371 = vsel %vm365, 1, 0
        %v372 = vsel %vm366, 1, 0
        %v373 = vsel %vm367, 1, 0
        %vm374 = vcmp.eq.s32.totalorder %v368, 1
        %vm375 = vcmp.eq.s32.totalorder %v369, 1
        %vm376 = vcmp.eq.s32.totalorder %v370, 1
        %vm377 = vcmp.eq.s32.totalorder %v371, 1
        %vm378 = vcmp.eq.s32.totalorder %v372, 1
        %vm379 = vcmp.eq.s32.totalorder %v373, 1
        %v380 = vsel %vm374, %v349, %v252
        %v381 = vsel %vm375, %v350, %v253
        %v382 = vsel %vm376, %v351, %v254
        %v383 = vsel %vm377, %v352, %v255
        %v384 = vsel %vm378, %v353, %v256
        %v385 = vsel %vm379, %v354, %v257
        %v386 = vpack.c.bf16 %v381, %v380
        %v387 = vpack.c.bf16 %v383, %v382
        %v388 = vpack.c.bf16 %v385, %v384
        %v389 = vld [vmem:[%s1] sm:$0xf]
        %v390 = vld [vmem:[%s1 + $0x4] sm:$0xf]
        %v391 = vld [vmem:[%s1 + $0x8] sm:$0xf]
        %v392 = vld [vmem:[%s1 + $0xc] sm:$0xf]
        %v393 = vld [vmem:[%s1 + $0x10] sm:$0xf]
        %v394 = vld [vmem:[%s1 + $0x14] sm:$0xf]
        %v395 = vld [vmem:[%s1 + $0x18] sm:$0xf]
        %v396 = vld [vmem:[%s1 + $0x1c] sm:$0xf]
        %v397 = vld [vmem:[%s1 + $0x20] sm:$0xf]
        %v398 = vld [vmem:[%s1 + $0x24] sm:$0xf]
        %v399 = vld [vmem:[%s1 + $0x28] sm:$0xf]
        %v400 = vld [vmem:[%s1 + $0x2c] sm:$0xf]
        %v401 = vld [vmem:[%s1 + $0x30] sm:$0xf]
        %v402 = vld [vmem:[%s1 + $0x34] sm:$0xf]
        %v403 = vld [vmem:[%s1 + $0x38] sm:$0xf]
        %v404 = vld [vmem:[%s1 + $0x3c] sm:$0xf]
        %v405 = vld [vmem:[%s1 + $0x40] sm:$0xf]
        %v406 = vld [vmem:[%s1 + $0x44] sm:$0xf]
        %v407 = vld [vmem:[%s1 + $0x48] sm:$0xf]
        %v408 = vld [vmem:[%s1 + $0x4c] sm:$0xf]
        %v429 = vunpack.c.l.b16 %v389
        %v430 = vunpack.c.l.b16 %v390
        %v431 = vunpack.c.l.b16 %v391
        %v432 = vunpack.c.l.b16 %v392
        %v433 = vunpack.c.l.b16 %v393
        %v434 = vunpack.c.l.b16 %v394
        %v435 = vunpack.c.l.b16 %v395
        %v436 = vunpack.c.l.b16 %v396
        %v437 = vunpack.c.l.b16 %v397
        %v438 = vunpack.c.l.b16 %v398
        %v439 = vunpack.c.l.b16 %v399
        %v440 = vunpack.c.l.b16 %v400
        %v441 = vunpack.c.l.b16 %v401
        %v442 = vunpack.c.l.b16 %v402
        %v443 = vunpack.c.l.b16 %v403
        %v444 = vunpack.c.l.b16 %v404
        %v445 = vunpack.c.l.b16 %v405
        %v446 = vunpack.c.l.b16 %v406
        %v447 = vunpack.c.l.b16 %v407
        %v448 = vunpack.c.l.b16 %v408
        %v449 = vpack.c.b16 %v430, %v429
        %v450 = vpack.c.b16 %v432, %v431
        %v451 = vpack.c.b16 %v434, %v433
        %v452 = vpack.c.b16 %v436, %v435
        %v453 = vpack.c.b16 %v438, %v437
        %v454 = vpack.c.b16 %v440, %v439
        %v455 = vpack.c.b16 %v442, %v441
        %v456 = vpack.c.b16 %v444, %v443
        %v457 = vpack.c.b16 %v446, %v445
        %v458 = vpack.c.b16 %v448, %v447
        %vm459 = vcmask 392192
        %v461 = vsel %vm459, %v449, 0
        %v464 = vsel %vm459, %v450, 0
        %v467 = vsel %vm459, %v451, 0
        %v470 = vsel %vm459, %v452, 0
        %v473 = vsel %vm459, %v453, 0
        %v476 = vsel %vm459, %v454, 0
        %v479 = vsel %vm459, %v455, 0
        %v482 = vsel %vm459, %v456, 0
        %v485 = vsel %vm459, %v457, 0
        %v488 = vsel %vm459, %v458, 0
        %490 = vmatprep.subr.bf16.mxu0 0
        %491 = vmatpush1.bf16.msra.mxu0 %v386
        %492 = vmatprep.subr.bf16.mxu0 0
        %493 = vmatpush1.bf16.msra.mxu0 %v387
        %494 = vmatprep.subr.bf16.mxu0 0
        %495 = vmatpush1.bf16.msra.mxu0 %v388
        %496 = vmatprep.subr.bf16.mxu0 0
        %497 = vmatpush1.bf16.msra.mxu0 0
        %498 = vmatprep.subr.bf16.mxu0 0
        %499 = vmatpush1.bf16.msra.mxu0 0
        %500 = vmatprep.subr.bf16.mxu0 0
        %501 = vmatpush1.bf16.msra.mxu0 0
        %502 = vmatprep.subr.bf16.mxu0 0
        %503 = vmatpush1.bf16.msra.mxu0 0
        %504 = vmatprep.subr.bf16.mxu0 0
        %505 = vmatpush1.bf16.msra.mxu0 0
        %506 = vmatprep.subr.bf16.mxu0 0
        %507 = vmatpush1.bf16.msra.mxu0 0
        %508 = vmatprep.subr.bf16.mxu0 0
        %509 = vmatpush1.bf16.msra.mxu0 0
        %510 = vmatprep.subr.bf16.mxu0 0
        %511 = vmatpush1.bf16.msra.mxu0 0
        %512 = vmatprep.subr.bf16.mxu0 0
        %513 = vmatpush1.bf16.msra.mxu0 0
        %514 = vmatprep.subr.bf16.mxu0 0
        %515 = vmatpush1.bf16.msra.mxu0 0
        %516 = vmatprep.subr.bf16.mxu0 0
        %517 = vmatpush1.bf16.msra.mxu0 0
        %518 = vmatprep.subr.bf16.mxu0 0
        %519 = vmatpush1.bf16.msra.mxu0 0
        %520 = vmatprep.subr.bf16.mxu0 0
        %521 = vmatpush1.bf16.msra.mxu0 0
        %522 = vmatprep.mubr.bf16.mxu0 0
        %523 = vmatmul.mubr.bf16.gmra.mrb[0].mxu0 %v461
        %v524 = vpop.f32.mrb[0].mxu0
        %v525 = vadd.f32 0.0, %v524
        %v526 = vpop.f32.mrb[0].mxu0
        %v527 = vpop.f32.mrb[0].mxu0
        %v528 = vadd.f32 0.0, %v527
        %v529 = vpop.f32.mrb[0].mxu0
        %530 = vmatprep.mubr.bf16.mxu0 0
        %531 = vmatmul.mubr.bf16.gmra.mrb[0].mxu0 %v464
        %v532 = vpop.f32.mrb[0].mxu0
        %v533 = vadd.f32 0.0, %v532
        %v534 = vpop.f32.mrb[0].mxu0
        %v535 = vpop.f32.mrb[0].mxu0
        %v536 = vadd.f32 0.0, %v535
        %v537 = vpop.f32.mrb[0].mxu0
        %538 = vmatprep.mubr.bf16.mxu0 0
        %539 = vmatmul.mubr.bf16.gmra.mrb[0].mxu0 %v467
        %v540 = vpop.f32.mrb[0].mxu0
        %v541 = vadd.f32 0.0, %v540
        %v542 = vpop.f32.mrb[0].mxu0
        %v543 = vpop.f32.mrb[0].mxu0
        %v544 = vadd.f32 0.0, %v543
        %v545 = vpop.f32.mrb[0].mxu0
        %546 = vmatprep.mubr.bf16.mxu0 0
        %547 = vmatmul.mubr.bf16.gmra.mrb[0].mxu0 %v470
        %v548 = vpop.f32.mrb[0].mxu0
        %v549 = vadd.f32 0.0, %v548
        %v550 = vpop.f32.mrb[0].mxu0
        %v551 = vpop.f32.mrb[0].mxu0
        %v552 = vadd.f32 0.0, %v551
        %v553 = vpop.f32.mrb[0].mxu0
        %554 = vmatprep.mubr.bf16.mxu0 0
        %555 = vmatmul.mubr.bf16.gmra.mrb[0].mxu0 %v473
        %v556 = vpop.f32.mrb[0].mxu0
        %v557 = vadd.f32 0.0, %v556
        %v558 = vpop.f32.mrb[0].mxu0
        %v559 = vpop.f32.mrb[0].mxu0
        %v560 = vadd.f32 0.0, %v559
        %v561 = vpop.f32.mrb[0].mxu0
        %562 = vmatprep.mubr.bf16.mxu0 0
        %563 = vmatmul.mubr.bf16.gmra.mrb[0].mxu0 %v476
        %v564 = vpop.f32.mrb[0].mxu0
        %v565 = vadd.f32 0.0, %v564
        %v566 = vpop.f32.mrb[0].mxu0
        %v567 = vpop.f32.mrb[0].mxu0
        %v568 = vadd.f32 0.0, %v567
        %v569 = vpop.f32.mrb[0].mxu0
        %570 = vmatprep.mubr.bf16.mxu0 0
        %571 = vmatmul.mubr.bf16.gmra.mrb[0].mxu0 %v479
        %v572 = vpop.f32.mrb[0].mxu0
        %v573 = vadd.f32 0.0, %v572
        %v574 = vpop.f32.mrb[0].mxu0
        %v575 = vpop.f32.mrb[0].mxu0
        %v576 = vadd.f32 0.0, %v575
        %v577 = vpop.f32.mrb[0].mxu0
        %578 = vmatprep.mubr.bf16.mxu0 0
        %579 = vmatmul.mubr.bf16.gmra.mrb[0].mxu0 %v482
        %v580 = vpop.f32.mrb[0].mxu0
        %v581 = vadd.f32 0.0, %v580
        %v582 = vpop.f32.mrb[0].mxu0
        %v583 = vpop.f32.mrb[0].mxu0
        %v584 = vadd.f32 0.0, %v583
        %v585 = vpop.f32.mrb[0].mxu0
        %586 = vmatprep.mubr.bf16.mxu0 0
        %587 = vmatmul.mubr.bf16.gmra.mrb[0].mxu0 %v485
        %v588 = vpop.f32.mrb[0].mxu0
        %v589 = vadd.f32 0.0, %v588
        %v590 = vpop.f32.mrb[0].mxu0
        %v591 = vpop.f32.mrb[0].mxu0
        %v592 = vadd.f32 0.0, %v591
        %v593 = vpop.f32.mrb[0].mxu0
        %594 = vmatprep.mubr.bf16.mxu0 0
        %595 = vmatmul.mubr.bf16.gmra.mrb[0].mxu0 %v488
        %v596 = vpop.f32.mrb[0].mxu0
        %v597 = vadd.f32 0.0, %v596
        %v598 = vpop.f32.mrb[0].mxu0
        %v599 = vpop.f32.mrb[0].mxu0
        %v600 = vadd.f32 0.0, %v599
        %v601 = vpop.f32.mrb[0].mxu0
        %602 = vdwg.mxu0
        %v603 = vmax.f32 %v525, 0.0
        %v604 = vmax.f32 %v528, 0.0
        %v605 = vmax.f32 %v533, 0.0
        %v606 = vmax.f32 %v536, 0.0
        %v607 = vmax.f32 %v541, 0.0
        %v608 = vmax.f32 %v544, 0.0
        %v609 = vmax.f32 %v549, 0.0
        %v610 = vmax.f32 %v552, 0.0
        %v611 = vmax.f32 %v557, 0.0
        %v612 = vmax.f32 %v560, 0.0
        %v613 = vmax.f32 %v565, 0.0
        %v614 = vmax.f32 %v568, 0.0
        %v615 = vmax.f32 %v573, 0.0
        %v616 = vmax.f32 %v576, 0.0
        %v617 = vmax.f32 %v581, 0.0
        %v618 = vmax.f32 %v584, 0.0
        %v619 = vmax.f32 %v589, 0.0
        %v620 = vmax.f32 %v592, 0.0
        %v621 = vmax.f32 %v597, 0.0
        %v622 = vmax.f32 %v600, 0.0
        %v623 = vld [vmem:[%s2] sm:$0x3]
        %v625 = vlaneseq
        %v626 = vshrl.u32 %v625, 7
        %v627 = vsub.s32 0, %v626
        %v628 = vrot.slane %v623, %v627
        %v629 = vlaneseq
        %v630 = vshrl.u32 %v629, 7
        %v631 = vsub.s32 1, %v630
        %v632 = vrot.slane %v623, %v631
        %vm634 = vcmask 261120
        %v635 = vsel %vm634, %v632, 0
        %637 = vmatprep.subr.mxu0 0.0
        %638 = vmatpush1.msra.mxu0 %v603
        %639 = vmatprep.subr.mxu0 0.0
        %640 = vmatpush1.msra.mxu0 %v604
        %641 = vmatprep.subr.mxu0 0.0
        %642 = vmatpush1.msra.mxu0 %v605
        %643 = vmatprep.subr.mxu0 0.0
        %644 = vmatpush1.msra.mxu0 %v606
        %645 = vmatprep.subr.mxu0 0.0
        %646 = vmatpush1.msra.mxu0 %v607
        %647 = vmatprep.subr.mxu0 0.0
        %648 = vmatpush1.msra.mxu0 %v608
        %649 = vmatprep.subr.mxu0 0.0
        %650 = vmatpush1.msra.mxu0 %v609
        %651 = vmatprep.subr.mxu0 0.0
        %652 = vmatpush1.msra.mxu0 %v610
        %653 = vmatprep.subr.mxu0 0.0
        %654 = vmatpush1.msra.mxu0 %v611
        %655 = vmatprep.subr.mxu0 0.0
        %656 = vmatpush1.msra.mxu0 %v612
        %657 = vmatprep.subr.mxu0 0.0
        %658 = vmatpush1.msra.mxu0 %v613
        %659 = vmatprep.subr.mxu0 0.0
        %660 = vmatpush1.msra.mxu0 %v614
        %661 = vmatprep.subr.mxu0 0.0
        %662 = vmatpush1.msra.mxu0 %v615
        %663 = vmatprep.subr.mxu0 0.0
        %664 = vmatpush1.msra.mxu0 %v616
        %665 = vmatprep.subr.mxu0 0.0
        %666 = vmatpush1.msra.mxu0 %v617
        %667 = vmatprep.subr.mxu0 0.0
        %668 = vmatpush1.msra.mxu0 %v618
        %669 = vmatprep.subr.mxu0 0.0
        %670 = vmatpush1.msra.mxu0 %v619
        %671 = vmatprep.subr.mxu0 0.0
        %672 = vmatpush1.msra.mxu0 %v620
        %673 = vmatprep.subr.mxu0 0.0
        %674 = vmatpush1.msra.mxu0 %v621
        %675 = vmatprep.subr.mxu0 0.0
        %676 = vmatpush1.msra.mxu0 %v622
        %677 = vmatprep.subr.mxu0 0.0
        %678 = vmatpush1.msra.mxu0 0.0
        %679 = vmatprep.subr.mxu0 0.0
        %680 = vmatpush1.msra.mxu0 0.0
        %681 = vmatprep.subr.mxu0 0.0
        %682 = vmatpush1.msra.mxu0 0.0
        %683 = vmatprep.subr.mxu0 0.0
        %684 = vmatpush1.msra.mxu0 0.0
        %685 = vmatprep.subr.mxu0 0.0
        %686 = vmatpush1.msra.mxu0 0.0
        %687 = vmatprep.subr.mxu0 0.0
        %688 = vmatpush1.msra.mxu0 0.0
        %689 = vmatprep.subr.mxu0 0.0
        %690 = vmatpush1.msra.mxu0 0.0
        %691 = vmatprep.subr.mxu0 0.0
        %692 = vmatpush1.msra.mxu0 0.0
        %693 = vmatprep.subr.mxu0 0.0
        %694 = vmatpush1.msra.mxu0 0.0
        %695 = vmatprep.subr.mxu0 0.0
        %696 = vmatpush1.msra.mxu0 0.0
        %697 = vmatprep.subr.mxu0 0.0
        %698 = vmatpush1.msra.mxu0 0.0
        %699 = vmatprep.subr.mxu0 0.0
        %700 = vmatpush1.msra.mxu0 0.0
        %701 = vmatprep.mubr.f32.mxu0 %v635
        %702 = vmatmul.mubr.f32.gmra.mrb[0].mxu0 %v628
        %v703 = vpop.f32.mrb[0].mxu0
        %v704 = vadd.f32 0.0, %v703
        %v705 = vpop.f32.mrb[0].mxu0
        %706 = vdwg.mxu0
        %v707 = vpack.c.bf16 %v704, %v704
        %v708 = vld [vmem:[%s3] sm:$0xf]
        %v709 = vld [vmem:[%s3 + $0x4] sm:$0xf]
        %v710 = vld [vmem:[%s3 + $0x8] sm:$0xf]
        %v711 = vld [vmem:[%s3 + $0xc] sm:$0xf]
        %v712 = vld [vmem:[%s3 + $0x10] sm:$0xf]
        %v713 = vld [vmem:[%s3 + $0x14] sm:$0xf]
        %v714 = vld [vmem:[%s3 + $0x18] sm:$0xf]
        %v715 = vld [vmem:[%s3 + $0x1c] sm:$0xf]
        %v716 = vld [vmem:[%s3 + $0x20] sm:$0xf]
        %v717 = vld [vmem:[%s3 + $0x24] sm:$0xf]
        %v718 = vld [vmem:[%s3 + $0x28] sm:$0xf]
        %v719 = vld [vmem:[%s3 + $0x2c] sm:$0xf]
        %v720 = vld [vmem:[%s3 + $0x30] sm:$0xf]
        %v721 = vld [vmem:[%s3 + $0x34] sm:$0xf]
        %v722 = vld [vmem:[%s3 + $0x38] sm:$0xf]
        %v723 = vld [vmem:[%s3 + $0x3c] sm:$0xf]
        %v740 = vunpack.c.l.b16 %v708
        %v741 = vunpack.c.l.b16 %v709
        %v742 = vunpack.c.l.b16 %v710
        %v743 = vunpack.c.l.b16 %v711
        %v744 = vunpack.c.l.b16 %v712
        %v745 = vunpack.c.l.b16 %v713
        %v746 = vunpack.c.l.b16 %v714
        %v747 = vunpack.c.l.b16 %v715
        %v748 = vunpack.c.l.b16 %v716
        %v749 = vunpack.c.l.b16 %v717
        %v750 = vunpack.c.l.b16 %v718
        %v751 = vunpack.c.l.b16 %v719
        %v752 = vunpack.c.l.b16 %v720
        %v753 = vunpack.c.l.b16 %v721
        %v754 = vunpack.c.l.b16 %v722
        %v755 = vunpack.c.l.b16 %v723
        %v756 = vpack.c.b16 %v741, %v740
        %v757 = vpack.c.b16 %v743, %v742
        %v758 = vpack.c.b16 %v745, %v744
        %v759 = vpack.c.b16 %v747, %v746
        %v760 = vpack.c.b16 %v749, %v748
        %v761 = vpack.c.b16 %v751, %v750
        %v762 = vpack.c.b16 %v753, %v752
        %v763 = vpack.c.b16 %v755, %v754
        %772 = vmatprep.subr.bf16.mxu0 0
        %773 = vmatpush1.bf16.msra.mxu0 %v756
        %774 = vmatprep.subr.bf16.mxu0 0
        %775 = vmatpush1.bf16.msra.mxu0 %v757
        %776 = vmatprep.subr.bf16.mxu0 0
        %777 = vmatpush1.bf16.msra.mxu0 %v758
        %778 = vmatprep.subr.bf16.mxu0 0
        %779 = vmatpush1.bf16.msra.mxu0 %v759
        %780 = vmatprep.subr.bf16.mxu0 0
        %781 = vmatpush1.bf16.msra.mxu0 %v760
        %782 = vmatprep.subr.bf16.mxu0 0
        %783 = vmatpush1.bf16.msra.mxu0 %v761
        %784 = vmatprep.subr.bf16.mxu0 0
        %785 = vmatpush1.bf16.msra.mxu0 %v762
        %786 = vmatprep.subr.bf16.mxu0 0
        %787 = vmatpush1.bf16.msra.mxu0 %v763
        %788 = vmatprep.subr.bf16.mxu0 0
        %789 = vmatpush1.bf16.msra.mxu0 0
        %790 = vmatprep.subr.bf16.mxu0 0
        %791 = vmatpush1.bf16.msra.mxu0 0
        %792 = vmatprep.subr.bf16.mxu0 0
        %793 = vmatpush1.bf16.msra.mxu0 0
        %794 = vmatprep.subr.bf16.mxu0 0
        %795 = vmatpush1.bf16.msra.mxu0 0
        %796 = vmatprep.subr.bf16.mxu0 0
        %797 = vmatpush1.bf16.msra.mxu0 0
        %798 = vmatprep.subr.bf16.mxu0 0
        %799 = vmatpush1.bf16.msra.mxu0 0
        %800 = vmatprep.subr.bf16.mxu0 0
        %801 = vmatpush1.bf16.msra.mxu0 0
        %802 = vmatprep.subr.bf16.mxu0 0
        %803 = vmatpush1.bf16.msra.mxu0 0
        %804 = vmatprep.mubr.bf16.mxu0 0
        %805 = vmatmul.mubr.bf16.gmra.mrb[0].mxu0 %v707
        %v806 = vpop.f32.mrb[0].mxu0
        %v807 = vadd.f32 %v245, %v806
        %v808 = vpop.f32.mrb[0].mxu0
        %v809 = vpop.f32.mrb[0].mxu0
        %v810 = vpop.f32.mrb[0].mxu0
        %811 = vdwg.mxu0
        %vm812 = vcmask 1040384
        %v813 = vsel %vm812, %v807, -inf
        %814 = vmax.xlane.f32.xlu0 %v813
        %v815 = vpop.xlane.xlu0 %814
        %v816 = vsub.f32 %v807, %v815
        %v817 = vmul.f32 %v816, 1.442695
        %v818 = vpow.pop %v817
        %v819 = vsel %vm812, %v818, 0.0
        %820 = vadd.xlane.f32.xlu0 %v819
        %v821 = vpop.xlane.xlu0 %820
        %v822 = vrcp.pop %v821
        %v823 = vmul.f32 %v818, %v822
        %824 = vst [vmem:[%s241] sm:$0x1] %v823
        %s825 = sand.u32 %s140, 1
        %s826 = scalar_lea.sflag [#allocation4], %s825
        %s827 = sand.u32 %s140, 1
        %s828 = scalar_lea.vmem [#allocation5], %s827
        // Predicated region
        $region45: #{tpu_custom_call.1} parent=39 // pred_check
          %p829 = pneg %p150
        $region46: #{tpu_custom_call.1} parent=39 // pred_check_branch
          %831 = sbr.rel (%p829) target = $region48
        $region47: #{tpu_custom_call.1} parent=39 // pred_region
          %s833 = ssub.s32 16, 16
          %834 = vsyncadd %s826, %s833
          %s835 = smul.addr %s22, 16
          %s836 = scalar_lea.hbm %s5, %s835
          %s838 = sshll.u32 %s828, 4
          %s839 = int_to_ptr.vmem [resolvable:$true] %s838
          %841 = dma.vmem_to_hbm [thread:$0]  %s839, 16, %s836, %s826
        $region48: #{tpu_custom_call.1} parent=39 // pred_fallthru
          _
      $region40: #{tpu_custom_call.1} parent=5 // pred_fallthru
        _
      %p842 = scmp.le.s32.totalorder 2, %s17
      // Predicated region
      $region49: #{tpu_custom_call.1} parent=5 // pred_check
        %p843 = pneg %p842
      $region50: #{tpu_custom_call.1} parent=5 // pred_check_branch
        %845 = sbr.rel (%p843) target = $region52
      $region51: #{tpu_custom_call.1} parent=5 // pred_region
        %s846 = ssub.s32 %s17, 2
        // Predicated region
        $region53: #{tpu_custom_call.1} parent=51 // pred_check
          %p847 = pneg %p156
        $region54: #{tpu_custom_call.1} parent=51 // pred_check_branch
          %849 = sbr.rel (%p847) target = $region56
        $region55: #{tpu_custom_call.1} parent=51 // pred_region
          %s850 = sand.u32 %s141, 1
          %s851 = scalar_lea.sflag [#allocation4], %s850
          %s852 = sand.u32 %s141, 1
          %s853 = scalar_lea.vmem [#allocation5], %s852
          %854 = dma.done %s851, 16
        $region56: #{tpu_custom_call.1} parent=51 // pred_fallthru
          _
      $region52: #{tpu_custom_call.1} parent=5 // pred_fallthru
        _
    $region6: #{tpu_custom_call.1} parent=1 // loop_footer
      %s21 = sadd.s32 1, %s17
    $region7: #{tpu_custom_call.1} parent=1 // loop_footer_branch
      %16 = sbr.rel target = $region3
    $region8: #{tpu_custom_call.1} parent=1 // loop_exit
      _
    %855 = vsyncpa [#allocation3], 1
    %s856 = scalar_lea.sflag [#allocation3], 1
    %857 = vsyncpa %s856, 1
    %858 = vsyncpa [#allocation4], 1
    %s859 = scalar_lea.sflag [#allocation4], 1
    %860 = vsyncpa %s859, 1

</llo_original>
